<compile_context>
chip_gen: v6e
topology: v6e:2x2x1
jax: 0.10.0
libtpu: 0.0.40
codegen_flags: <defaults>
</compile_context>

<pallas_src>
import functools

import jax
import jax.numpy as jnp
from jax.experimental import pallas as pl
from jax.experimental.pallas import tpu as pltpu

# --- small, module-consistent sizes -----------------------------------------
B = 2              # batch
C = 4              # inplanes (input channels)
N_, M_ = 8, 8      # board height / width  -> S spatial positions
S = N_ * M_
HIDDEN = 512       # fixed by the module (fc1 output)
OUTPLANES = N_ * M_ + 1   # board moves + pass  (= 65)
OUT_PAD = 128             # lane-dense padded output width
BN_EPS = 1e-5


def _round_up(x, m):
    return ((x + m - 1) // m) * m


# --- Pallas kernel -----------------------------------------------------------
def policy_kernel(x_ref, wconv_ref, bconv_ref, w1_ref, b1_ref, w2_ref, b2_ref,
                  out_ref):
    # x_ref:     (tb, C, S)  VMEM f32
    # wconv_ref: (2, C)      SMEM  (conv weight folded with BN scale)
    # bconv_ref: (2,)        SMEM  (conv bias folded with BN shift)
    # w1_ref:    (2*S, 512)  VMEM  (fc1_w.T)
    # b1_ref:    (1, 512)    VMEM
    # w2_ref:    (512, 128)  VMEM  (fc2_w.T zero-padded to 128 cols)
    # b2_ref:    (1, 128)    VMEM  (padded lanes = -1e30)
    # out_ref:   (tb, 128)   VMEM
    x = x_ref[...]                                            # (tb, C, S)

    # 1x1 conv (+ folded BN) + ReLU, unrolled: 8 scalar-vector FMAs on the VPU.
    # Halves are concatenated along lanes -> matches PyTorch NCHW view(-1, 2*N*M).
    halves = []
    for o in range(2):
        acc = x[:, 0, :] * wconv_ref[o, 0]
        for c in range(1, C):
            acc = acc + x[:, c, :] * wconv_ref[o, c]
        halves.append(jnp.maximum(acc + bconv_ref[o], 0.0))   # (tb, S)
    h = jnp.concatenate(halves, axis=-1)                      # (tb, 2*S) = (tb, 128)

    # fc1: single K=128 MXU dot.
    z1 = jnp.dot(h, w1_ref[...], preferred_element_type=jnp.float32) + b1_ref[...]
    z1 = jnp.maximum(z1, 0.0)                                 # (tb, 512)

    # fc2: lane-dense padded N=128 MXU dot.
    z2 = jnp.dot(z1, w2_ref[...], preferred_element_type=jnp.float32) + b2_ref[...]

    # logsoftmax(dim=1).exp() == softmax; padded lanes carry -1e30 bias -> exp()==0.
    z2 = z2 - jnp.max(z2, axis=-1, keepdims=True)
    e = jnp.exp(z2)
    inv = pl.reciprocal(jnp.sum(e, axis=-1, keepdims=True), approx=False)
    out_ref[...] = e * inv                                    # (tb, 128)


# --- wrapper -----------------------------------------------------------------
@functools.partial(jax.jit, static_argnames=("tile_b",))
def policy_forward(x_bcs, weff, beff, w1t, b1, w2t_pad, b2_pad, *, tile_b=256):
    Bn = x_bcs.shape[0]
    tb = min(tile_b, _round_up(Bn, 8))        # batch tile (multiple of 8 sublanes)
    Bp = _round_up(Bn, tb)
    if Bp != Bn:
        x_bcs = jnp.pad(x_bcs, ((0, Bp - Bn), (0, 0), (0, 0)))

    out = pl.pallas_call(
        policy_kernel,
        out_shape=jax.ShapeDtypeStruct((Bp, OUT_PAD), jnp.float32),
        grid_spec=pltpu.PrefetchScalarGridSpec(
            num_scalar_prefetch=0,
            grid=(Bp // tb,),
            in_specs=[
                pl.BlockSpec((tb, C, S), lambda i: (i, 0, 0)),           # x
                pl.BlockSpec(memory_space=pltpu.MemorySpace.SMEM),       # weff
                pl.BlockSpec(memory_space=pltpu.MemorySpace.SMEM),       # beff
                pl.BlockSpec((2 * S, HIDDEN), lambda i: (0, 0)),         # w1t
                pl.BlockSpec((1, HIDDEN), lambda i: (0, 0)),             # b1
                pl.BlockSpec((HIDDEN, OUT_PAD), lambda i: (0, 0)),       # w2t
                pl.BlockSpec((1, OUT_PAD), lambda i: (0, 0)),            # b2
            ],
            out_specs=pl.BlockSpec((tb, OUT_PAD), lambda i: (i, 0)),
        ),
        compiler_params=pltpu.CompilerParams(
            dimension_semantics=("parallel",)),                          # v7x megacore
    )(x_bcs, weff, beff, w1t, b1, w2t_pad, b2_pad)

    return out[:Bn, :OUTPLANES]


# --- pure-JAX reference (mirrors the PyTorch forward, eval-mode BN) -----------
def reference(x_nchw, conv_w, conv_b, bn_g, bn_b, bn_m, bn_v,
              fc1_w, fc1_b, fc2_w, fc2_b):
    y = jnp.einsum('oc,bchw->bohw', conv_w[:, :, 0, 0], x_nchw) \
        + conv_b[None, :, None, None]
    y = (y - bn_m[None, :, None, None]) \
        / jnp.sqrt(bn_v[None, :, None, None] + BN_EPS) \
        * bn_g[None, :, None, None] + bn_b[None, :, None, None]
    y = jnp.maximum(y, 0.0)
    y = y.reshape(y.shape[0], -1)                         # (B, 2*N*M), NCHW order
    y = jnp.maximum(y @ fc1_w.T + fc1_b, 0.0)
    y = y @ fc2_w.T + fc2_b
    return jnp.exp(jax.nn.log_softmax(y, axis=1))


if __name__ == "__main__":
    key = jax.random.PRNGKey(0)
    kx, kcw, kcb, k1w, k1b, k2w, k2b = jax.random.split(key, 7)

    # deterministic synthetic parameters (shapes from the module __init__)
    conv_w = jax.random.uniform(kcw, (2, C, 1, 1), jnp.float32, -0.5, 0.5)
    conv_b = jax.random.uniform(kcb, (2,), jnp.float32, -0.5, 0.5)
    bn_g = jnp.ones((2,), jnp.float32)          # BatchNorm2d(2), eval mode
    bn_b = jnp.zeros((2,), jnp.float32)
    bn_m = jnp.zeros((2,), jnp.float32)
    bn_v = jnp.ones((2,), jnp.float32)
    fc1_w = jax.random.uniform(k1w, (HIDDEN, 2 * S), jnp.float32, -0.05, 0.05)
    fc1_b = jax.random.uniform(k1b, (HIDDEN,), jnp.float32, -0.05, 0.05)
    fc2_w = jax.random.uniform(k2w, (OUTPLANES, HIDDEN), jnp.float32, -0.05, 0.05)
    fc2_b = jax.random.uniform(k2b, (OUTPLANES,), jnp.float32, -0.05, 0.05)

    # deterministic input, PyTorch NCHW
    x = jax.random.normal(kx, (B, C, N_, M_), jnp.float32)

    # --- glue: fold BN into the 1x1 conv, lay out tensors for the kernel -----
    scale = bn_g / jnp.sqrt(bn_v + BN_EPS)                       # (2,)
    weff = conv_w[:, :, 0, 0] * scale[:, None]                   # (2, C)   -> SMEM
    beff = (conv_b - bn_m) * scale + bn_b                        # (2,)     -> SMEM
    x_bcs = x.reshape(B, C, S)                                   # (B, C, S)

    w1t = fc1_w.T                                                # (2*S, 512)
    b1 = fc1_b[None, :]                                          # (1, 512)

    # pad fc2 output 65 -> 128 lanes: zero weight cols, -1e30 bias lanes
    w2t_pad = jnp.zeros((HIDDEN, OUT_PAD), jnp.float32).at[:, :OUTPLANES].set(fc2_w.T)
    b2_pad = jnp.full((OUT_PAD,), -1e30, jnp.float32).at[:OUTPLANES].set(fc2_b)[None, :]

    out = policy_forward(x_bcs, weff, beff, w1t, b1, w2t_pad, b2_pad)
    out = jax.block_until_ready(out)

    ref = reference(x, conv_w, conv_b, bn_g, bn_b, bn_m, bn_v,
                    fc1_w, fc1_b, fc2_w, fc2_b)
    assert out.shape == (B, OUTPLANES)
    assert jnp.allclose(out, ref, rtol=1e-4, atol=1e-5), "mismatch vs reference"

    print("KERNEL_OK")
</pallas_src>

<mosaic_0001>
module attributes {stable_mosaic.version = 11 : i64} {
  func.func @policy_kernel(%arg0: i32, %arg1: memref<8x4x64xf32, #tpu.memory_space<vmem>>, %arg2: memref<2x4xf32, #tpu.memory_space<smem>>, %arg3: memref<2xf32, #tpu.memory_space<smem>>, %arg4: memref<128x512xf32, #tpu.memory_space<vmem>>, %arg5: memref<1x512xf32, #tpu.memory_space<vmem>>, %arg6: memref<512x128xf32, #tpu.memory_space<vmem>>, %arg7: memref<1x128xf32, #tpu.memory_space<vmem>>, %arg8: memref<8x128xf32, #tpu.memory_space<vmem>>) attributes {dimension_semantics = [#tpu.dimension_semantics<parallel>], iteration_bounds = array<i64: 1>, scalar_prefetch = 0 : i64, scratch_operands = 0 : i64, tpu.core_type = #tpu.core_type<tc>, window_params = [{transform_indices = @transform_0, window_bounds = array<i64: 8, 4, 64>}, {transform_indices = @transform_1, window_bounds = array<i64: 2, 4>}, {transform_indices = @transform_2, window_bounds = array<i64: 2>}, {pipeline_mode = #tpu.pipeline_mode<synchronous>, transform_indices = @transform_3, window_bounds = array<i64: 128, 512>}, {pipeline_mode = #tpu.pipeline_mode<synchronous>, transform_indices = @transform_4, window_bounds = array<i64: 1, 512>}, {pipeline_mode = #tpu.pipeline_mode<synchronous>, transform_indices = @transform_5, window_bounds = array<i64: 512, 128>}, {pipeline_mode = #tpu.pipeline_mode<synchronous>, transform_indices = @transform_6, window_bounds = array<i64: 1, 128>}, {transform_indices = @transform_7, window_bounds = array<i64: 8, 128>}]} {
    %c0 = arith.constant 0 : index
    %c0_0 = arith.constant 0 : index
    %c0_1 = arith.constant 0 : index
    %0 = vector.load %arg1[%c0, %c0_0, %c0_1] : memref<8x4x64xf32, #tpu.memory_space<vmem>>, vector<8x4x64xf32>
    %1 = vector.extract_strided_slice %0 {offsets = [0, 0, 0], sizes = [8, 1, 64], strides = [1, 1, 1]} : vector<8x4x64xf32> to vector<8x1x64xf32>
    %2 = vector.shape_cast %1 : vector<8x1x64xf32> to vector<8x64xf32>
    %c0_2 = arith.constant 0 : index
    %c0_3 = arith.constant 0 : index
    %3 = memref.load %arg2[%c0_2, %c0_3] : memref<2x4xf32, #tpu.memory_space<smem>>
    %4 = vector.broadcast %3 : f32 to vector<8x64xf32>
    %5 = arith.mulf %2, %4 : vector<8x64xf32>
    %6 = vector.extract_strided_slice %0 {offsets = [0, 1, 0], sizes = [8, 1, 64], strides = [1, 1, 1]} : vector<8x4x64xf32> to vector<8x1x64xf32>
    %7 = vector.shape_cast %6 : vector<8x1x64xf32> to vector<8x64xf32>
    %c0_4 = arith.constant 0 : index
    %c1 = arith.constant 1 : index
    %8 = memref.load %arg2[%c0_4, %c1] : memref<2x4xf32, #tpu.memory_space<smem>>
    %9 = vector.broadcast %8 : f32 to vector<8x64xf32>
    %10 = arith.mulf %7, %9 : vector<8x64xf32>
    %11 = arith.addf %5, %10 : vector<8x64xf32>
    %12 = vector.extract_strided_slice %0 {offsets = [0, 2, 0], sizes = [8, 1, 64], strides = [1, 1, 1]} : vector<8x4x64xf32> to vector<8x1x64xf32>
    %13 = vector.shape_cast %12 : vector<8x1x64xf32> to vector<8x64xf32>
    %c0_5 = arith.constant 0 : index
    %c2 = arith.constant 2 : index
    %14 = memref.load %arg2[%c0_5, %c2] : memref<2x4xf32, #tpu.memory_space<smem>>
    %15 = vector.broadcast %14 : f32 to vector<8x64xf32>
    %16 = arith.mulf %13, %15 : vector<8x64xf32>
    %17 = arith.addf %11, %16 : vector<8x64xf32>
    %18 = vector.extract_strided_slice %0 {offsets = [0, 3, 0], sizes = [8, 1, 64], strides = [1, 1, 1]} : vector<8x4x64xf32> to vector<8x1x64xf32>
    %19 = vector.shape_cast %18 : vector<8x1x64xf32> to vector<8x64xf32>
    %c0_6 = arith.constant 0 : index
    %c3 = arith.constant 3 : index
    %20 = memref.load %arg2[%c0_6, %c3] : memref<2x4xf32, #tpu.memory_space<smem>>
    %21 = vector.broadcast %20 : f32 to vector<8x64xf32>
    %22 = arith.mulf %19, %21 : vector<8x64xf32>
    %23 = arith.addf %17, %22 : vector<8x64xf32>
    %c0_7 = arith.constant 0 : index
    %24 = memref.load %arg3[%c0_7] : memref<2xf32, #tpu.memory_space<smem>>
    %25 = vector.broadcast %24 : f32 to vector<8x64xf32>
    %26 = arith.addf %23, %25 : vector<8x64xf32>
    %cst = arith.constant 0.000000e+00 : f32
    %27 = vector.broadcast %cst : f32 to vector<8x64xf32>
    %28 = arith.maximumf %26, %27 : vector<8x64xf32>
    %29 = vector.extract_strided_slice %0 {offsets = [0, 0, 0], sizes = [8, 1, 64], strides = [1, 1, 1]} : vector<8x4x64xf32> to vector<8x1x64xf32>
    %30 = vector.shape_cast %29 : vector<8x1x64xf32> to vector<8x64xf32>
    %c1_8 = arith.constant 1 : index
    %c0_9 = arith.constant 0 : index
    %31 = memref.load %arg2[%c1_8, %c0_9] : memref<2x4xf32, #tpu.memory_space<smem>>
    %32 = vector.broadcast %31 : f32 to vector<8x64xf32>
    %33 = arith.mulf %30, %32 : vector<8x64xf32>
    %34 = vector.extract_strided_slice %0 {offsets = [0, 1, 0], sizes = [8, 1, 64], strides = [1, 1, 1]} : vector<8x4x64xf32> to vector<8x1x64xf32>
    %35 = vector.shape_cast %34 : vector<8x1x64xf32> to vector<8x64xf32>
    %c1_10 = arith.constant 1 : index
    %c1_11 = arith.constant 1 : index
    %36 = memref.load %arg2[%c1_10, %c1_11] : memref<2x4xf32, #tpu.memory_space<smem>>
    %37 = vector.broadcast %36 : f32 to vector<8x64xf32>
    %38 = arith.mulf %35, %37 : vector<8x64xf32>
    %39 = arith.addf %33, %38 : vector<8x64xf32>
    %40 = vector.extract_strided_slice %0 {offsets = [0, 2, 0], sizes = [8, 1, 64], strides = [1, 1, 1]} : vector<8x4x64xf32> to vector<8x1x64xf32>
    %41 = vector.shape_cast %40 : vector<8x1x64xf32> to vector<8x64xf32>
    %c1_12 = arith.constant 1 : index
    %c2_13 = arith.constant 2 : index
    %42 = memref.load %arg2[%c1_12, %c2_13] : memref<2x4xf32, #tpu.memory_space<smem>>
    %43 = vector.broadcast %42 : f32 to vector<8x64xf32>
    %44 = arith.mulf %41, %43 : vector<8x64xf32>
    %45 = arith.addf %39, %44 : vector<8x64xf32>
    %46 = vector.extract_strided_slice %0 {offsets = [0, 3, 0], sizes = [8, 1, 64], strides = [1, 1, 1]} : vector<8x4x64xf32> to vector<8x1x64xf32>
    %47 = vector.shape_cast %46 : vector<8x1x64xf32> to vector<8x64xf32>
    %c1_14 = arith.constant 1 : index
    %c3_15 = arith.constant 3 : index
    %48 = memref.load %arg2[%c1_14, %c3_15] : memref<2x4xf32, #tpu.memory_space<smem>>
    %49 = vector.broadcast %48 : f32 to vector<8x64xf32>
    %50 = arith.mulf %47, %49 : vector<8x64xf32>
    %51 = arith.addf %45, %50 : vector<8x64xf32>
    %c1_16 = arith.constant 1 : index
    %52 = memref.load %arg3[%c1_16] : memref<2xf32, #tpu.memory_space<smem>>
    %53 = vector.broadcast %52 : f32 to vector<8x64xf32>
    %54 = arith.addf %51, %53 : vector<8x64xf32>
    %cst_17 = arith.constant 0.000000e+00 : f32
    %55 = vector.broadcast %cst_17 : f32 to vector<8x64xf32>
    %56 = arith.maximumf %54, %55 : vector<8x64xf32>
    %57 = tpu.concatenate %28, %56 in 1 : vector<8x64xf32>, vector<8x64xf32> -> vector<8x128xf32>
    %c0_18 = arith.constant 0 : index
    %c0_19 = arith.constant 0 : index
    %58 = vector.load %arg4[%c0_18, %c0_19] : memref<128x512xf32, #tpu.memory_space<vmem>>, vector<128x512xf32>
    %cst_20 = arith.constant dense<0.000000e+00> : vector<8x512xf32>
    %59 = tpu.matmul %57, %58, %cst_20 {dimension_numbers = #tpu.dot_dimension_numbers<[1], [0], [0], [1], [0, 0, 1, 1], [], []>} : vector<8x128xf32>, vector<128x512xf32>, vector<8x512xf32> -> vector<8x512xf32>
    %c0_21 = arith.constant 0 : index
    %c0_22 = arith.constant 0 : index
    %60 = vector.load %arg5[%c0_21, %c0_22] : memref<1x512xf32, #tpu.memory_space<vmem>>, vector<1x512xf32>
    %61 = vector.broadcast %60 : vector<1x512xf32> to vector<8x512xf32>
    %62 = arith.addf %59, %61 : vector<8x512xf32>
    %cst_23 = arith.constant 0.000000e+00 : f32
    %63 = vector.broadcast %cst_23 : f32 to vector<8x512xf32>
    %64 = arith.maximumf %62, %63 : vector<8x512xf32>
    %c0_24 = arith.constant 0 : index
    %c0_25 = arith.constant 0 : index
    %65 = vector.load %arg6[%c0_24, %c0_25] : memref<512x128xf32, #tpu.memory_space<vmem>>, vector<512x128xf32>
    %cst_26 = arith.constant dense<0.000000e+00> : vector<8x128xf32>
    %66 = tpu.matmul %64, %65, %cst_26 {dimension_numbers = #tpu.dot_dimension_numbers<[1], [0], [0], [1], [0, 0, 1, 1], [], []>} : vector<8x512xf32>, vector<512x128xf32>, vector<8x128xf32> -> vector<8x128xf32>
    %c0_27 = arith.constant 0 : index
    %c0_28 = arith.constant 0 : index
    %67 = vector.load %arg7[%c0_27, %c0_28] : memref<1x128xf32, #tpu.memory_space<vmem>>, vector<1x128xf32>
    %68 = vector.broadcast %67 : vector<1x128xf32> to vector<8x128xf32>
    %69 = arith.addf %66, %68 : vector<8x128xf32>
    %cst_29 = arith.constant dense<0xFF800000> : vector<8xf32>
    %70 = vector.multi_reduction <maximumf>, %69, %cst_29 [1] : vector<8x128xf32> to vector<8xf32>
    %71 = vector.shape_cast %70 : vector<8xf32> to vector<8x1xf32>
    %72 = vector.broadcast %71 : vector<8x1xf32> to vector<8x128xf32>
    %73 = arith.subf %69, %72 : vector<8x128xf32>
    %74 = math.exp %73 : vector<8x128xf32>
    %cst_30 = arith.constant dense<0.000000e+00> : vector<8xf32>
    %75 = vector.multi_reduction <add>, %74, %cst_30 [1] : vector<8x128xf32> to vector<8xf32>
    %76 = vector.shape_cast %75 : vector<8xf32> to vector<8x1xf32>
    %77 = tpu.reciprocal %76 : vector<8x1xf32> -> vector<8x1xf32>
    %78 = vector.broadcast %77 : vector<8x1xf32> to vector<8x128xf32>
    %79 = arith.mulf %74, %78 : vector<8x128xf32>
    %c0_31 = arith.constant 0 : index
    %c0_32 = arith.constant 0 : index
    %80 = vector.load %arg8[%c0_31, %c0_32] : memref<8x128xf32, #tpu.memory_space<vmem>>, vector<8x128xf32>
    tpu.vector_store %arg8[%c0_31, %c0_32], %79 {strides = array<i32>} : memref<8x128xf32, #tpu.memory_space<vmem>>, vector<8x128xf32>,
    return
  }
  func.func @transform_0(%arg0: i32) -> (i32, i32, i32) {
    %c0_i32 = arith.constant 0 : i32
    %c0_i32_0 = arith.constant 0 : i32
    %c0_i32_1 = arith.constant 0 : i32
    return %arg0, %c0_i32, %c0_i32_0 : i32, i32, i32
  }
  func.func @transform_1(%arg0: i32) -> (i32, i32) {
    %c0_i32 = arith.constant 0 : i32
    %c0_i32_0 = arith.constant 0 : i32
    %c0_i32_1 = arith.constant 0 : i32
    return %c0_i32, %c0_i32_0 : i32, i32
  }
  func.func @transform_2(%arg0: i32) -> i32 {
    %c0_i32 = arith.constant 0 : i32
    %c0_i32_0 = arith.constant 0 : i32
    return %c0_i32 : i32
  }
  func.func @transform_3(%arg0: i32) -> (i32, i32) {
    %c0_i32 = arith.constant 0 : i32
    %c0_i32_0 = arith.constant 0 : i32
    %c0_i32_1 = arith.constant 0 : i32
    return %c0_i32, %c0_i32_0 : i32, i32
  }
  func.func @transform_4(%arg0: i32) -> (i32, i32) {
    %c0_i32 = arith.constant 0 : i32
    %c0_i32_0 = arith.constant 0 : i32
    %c0_i32_1 = arith.constant 0 : i32
    return %c0_i32, %c0_i32_0 : i32, i32
  }
  func.func @transform_5(%arg0: i32) -> (i32, i32) {
    %c0_i32 = arith.constant 0 : i32
    %c0_i32_0 = arith.constant 0 : i32
    %c0_i32_1 = arith.constant 0 : i32
    return %c0_i32, %c0_i32_0 : i32, i32
  }
  func.func @transform_6(%arg0: i32) -> (i32, i32) {
    %c0_i32 = arith.constant 0 : i32
    %c0_i32_0 = arith.constant 0 : i32
    %c0_i32_1 = arith.constant 0 : i32
    return %c0_i32, %c0_i32_0 : i32, i32
  }
  func.func @transform_7(%arg0: i32) -> (i32, i32) {
    %c0_i32 = arith.constant 0 : i32
    %c0_i32_0 = arith.constant 0 : i32
    return %arg0, %c0_i32 : i32, i32
  }
}

</mosaic_0001>

<llo_original>
// kernel: policy_forward.1
$region0: #{policy_forward.1}
  #allocation0 [shape = 'u32[]', space=smem, size = 0x4, offset = 0x4, fixed_abs, tag = 'smem constant byte address 0x4 - core index']
  #allocation1 [shape = 'u32[144,128]{1,0:T(1,128)}', space=vmem, size = 0x12000, scoped, tag = 'internal scratch']
  %s0 = inlined_call_operand.vmem [shape: f32[8,4,64], index: 0, kind: input, shape index: {}]
  %s1 = inlined_call_operand.vmem [shape: f32[2,4], index: 1, kind: input, shape index: {}]
  %s2 = inlined_call_operand.vmem [shape: f32[2], index: 2, kind: input, shape index: {}]
  %s3 = inlined_call_operand.hbm [shape: f32[128,512], index: 3, kind: input, shape index: {}]
  %s4 = inlined_call_operand.vmem [shape: f32[1,512], index: 4, kind: input, shape index: {}]
  %s5 = inlined_call_operand.hbm [shape: f32[512,128], index: 5, kind: input, shape index: {}]
  %s6 = inlined_call_operand.vmem [shape: f32[1,128], index: 6, kind: input, shape index: {}]
  %s7 = inlined_call_operand.vmem [shape: f32[8,128], index: 7, kind: output, shape index: {}]
  %s8 = sld [smem:[#allocation0]]
  $region54: #{policy_forward.1} parent=0
    _
  %s10 = ssub.s32 1, %s8
  %s11 = scalar_select 0, %s10, %s8
  $region1: #{policy_forward.1} parent=0
    #allocation2 [shape = 'u8[1024]{0}', space=smem, size = 0x400, scoped, tag = 'input window, operand 1, single buffered']
    #allocation3 [shape = 's32[1]{0}', space=sflag, size = 0x4, scoped, tag = 'scoped memory for policy_forward.1']
    #allocation4 [shape = 's32[1]{0}', space=sflag, size = 0x4, scoped, tag = 'scoped memory for policy_forward.1']
    #allocation5 [shape = 'u8[512]{0}', space=smem, size = 0x200, scoped, tag = 'input window, operand 2, single buffered']
    #allocation6 [shape = 's32[1]{0}', space=sflag, size = 0x4, scoped, tag = 'scoped memory for policy_forward.1']
    #allocation7 [shape = 'u8[262144]{0}', space=vmem, size = 0x40000, scoped, tag = 'input window, operand 3, single buffered']
    #allocation8 [shape = 'u8[262144]{0}', space=vmem, size = 0x40000, scoped, tag = 'input window, operand 5, single buffered']
    #allocation9 [shape = 's32[1]{0}', space=sflag, size = 0x4, scoped, tag = 'scoped memory for policy_forward.1']
    %12 = vsyncpa [#allocation4], 0
    %13 = vsyncpa [#allocation6], 0
    %14 = vsyncpa [#allocation3], 0
    %15 = vsyncpa [#allocation9], 0
    // Predicated region
    $region2: #{policy_forward.1} parent=1 // pred_check
      _
    $region3: #{policy_forward.1} parent=1 // pred_check_branch
      %17 = sbr.rel (0) target = $region5
    $region4: #{policy_forward.1} parent=1 // pred_region
      _
    $region5: #{policy_forward.1} parent=1 // pred_fallthru
      _
    // Predicated region
    $region6: #{policy_forward.1} parent=1 // pred_check
      _
    $region7: #{policy_forward.1} parent=1 // pred_check_branch
      %19 = sbr.rel (0) target = $region9
    $region8: #{policy_forward.1} parent=1 // pred_region
      %s21 = ssub.s32 32, 32
      %22 = vsyncadd [#allocation4], %s21
      %s24 = sshll.u32 %s1, 4
      %s25 = int_to_ptr.vmem [resolvable:$true] %s24
      %27 = dma.vmem_to_smem %s25, 32, [#allocation2], [#allocation4]
    $region9: #{policy_forward.1} parent=1 // pred_fallthru
      _
    // Predicated region
    $region10: #{policy_forward.1} parent=1 // pred_check
      _
    $region11: #{policy_forward.1} parent=1 // pred_check_branch
      %29 = sbr.rel (0) target = $region13
    $region12: #{policy_forward.1} parent=1 // pred_region
      %s31 = ssub.s32 16, 16
      %32 = vsyncadd [#allocation6], %s31
      %s34 = sshll.u32 %s2, 4
      %s35 = int_to_ptr.vmem [resolvable:$true] %s34
      %37 = dma.vmem_to_smem %s35, 16, [#allocation5], [#allocation6]
    $region13: #{policy_forward.1} parent=1 // pred_fallthru
      _
    // Predicated region
    $region14: #{policy_forward.1} parent=1 // pred_check
      _
    $region15: #{policy_forward.1} parent=1 // pred_check_branch
      %39 = sbr.rel (0) target = $region17
    $region16: #{policy_forward.1} parent=1 // pred_region
      %s41 = ssub.s32 8192, 8192
      %42 = vsyncadd [#allocation3], %s41
      %s43 = sshll.u32 [#allocation7], 4
      %s44 = int_to_ptr.vmem [resolvable:$true] %s43
      %49 = dma.hbm_to_vmem [thread:$0]  %s3, 8192, %s44, [#allocation3], 512, 512, 32
    $region17: #{policy_forward.1} parent=1 // pred_fallthru
      _
    // Predicated region
    $region18: #{policy_forward.1} parent=1 // pred_check
      _
    $region19: #{policy_forward.1} parent=1 // pred_check_branch
      %51 = sbr.rel (0) target = $region21
    $region20: #{policy_forward.1} parent=1 // pred_region
      _
    $region21: #{policy_forward.1} parent=1 // pred_fallthru
      _
    // Predicated region
    $region22: #{policy_forward.1} parent=1 // pred_check
      _
    $region23: #{policy_forward.1} parent=1 // pred_check_branch
      %53 = sbr.rel (0) target = $region25
    $region24: #{policy_forward.1} parent=1 // pred_region
      %s55 = ssub.s32 8192, 8192
      %56 = vsyncadd [#allocation9], %s55
      %s57 = sshll.u32 [#allocation8], 4
      %s58 = int_to_ptr.vmem [resolvable:$true] %s57
      %63 = dma.hbm_to_vmem [thread:$0]  %s5, 8192, %s58, [#allocation9], 128, 128, 8
    $region25: #{policy_forward.1} parent=1 // pred_fallthru
      _
    // Predicated region
    $region26: #{policy_forward.1} parent=1 // pred_check
      _
    $region27: #{policy_forward.1} parent=1 // pred_check_branch
      %65 = sbr.rel (0) target = $region29
    $region28: #{policy_forward.1} parent=1 // pred_region
      _
    $region29: #{policy_forward.1} parent=1 // pred_fallthru
      _
    // Predicated region
    $region30: #{policy_forward.1} parent=1 // pred_check
      _
    $region31: #{policy_forward.1} parent=1 // pred_check_branch
      %67 = sbr.rel (0) target = $region33
    $region32: #{policy_forward.1} parent=1 // pred_region
      %68 = dma.done [#allocation4], 32
    $region33: #{policy_forward.1} parent=1 // pred_fallthru
      _
    // Predicated region
    $region34: #{policy_forward.1} parent=1 // pred_check
      _
    $region35: #{policy_forward.1} parent=1 // pred_check_branch
      %70 = sbr.rel (0) target = $region37
    $region36: #{policy_forward.1} parent=1 // pred_region
      %71 = dma.done [#allocation6], 16
    $region37: #{policy_forward.1} parent=1 // pred_fallthru
      _
    // Predicated region
    $region38: #{policy_forward.1} parent=1 // pred_check
      _
    $region39: #{policy_forward.1} parent=1 // pred_check_branch
      %73 = sbr.rel (0) target = $region41
    $region40: #{policy_forward.1} parent=1 // pred_region
      %74 = dma.done [#allocation3], 8192
    $region41: #{policy_forward.1} parent=1 // pred_fallthru
      _
    // Predicated region
    $region42: #{policy_forward.1} parent=1 // pred_check
      _
    $region43: #{policy_forward.1} parent=1 // pred_check_branch
      %76 = sbr.rel (0) target = $region45
    $region44: #{policy_forward.1} parent=1 // pred_region
      %77 = dma.done [#allocation9], 8192
    $region45: #{policy_forward.1} parent=1 // pred_fallthru
      _
    %78 = sfence
    %v79 = vld [vmem:[%s0] sm:$0xf]
    %v80 = vld [vmem:[%s0 + $0x4] sm:$0xf]
    %v81 = vld [vmem:[%s0 + $0x8] sm:$0xf]
    %v82 = vld [vmem:[%s0 + $0xc] sm:$0xf]
    %v83 = vld [vmem:[%s0 + $0x10] sm:$0xf]
    %v84 = vld [vmem:[%s0 + $0x14] sm:$0xf]
    %v85 = vld [vmem:[%s0 + $0x18] sm:$0xf]
    %v86 = vld [vmem:[%s0 + $0x1c] sm:$0xf]
    %s87 = sld [smem:[#allocation2]]
    %v88 = vstv %s87
    %v89 = vmul.f32 %v79, %v88
    %v90 = vmul.f32 %v80, %v88
    %v91 = vmul.f32 %v81, %v88
    %v92 = vmul.f32 %v82, %v88
    %v93 = vmul.f32 %v83, %v88
    %v94 = vmul.f32 %v84, %v88
    %v95 = vmul.f32 %v85, %v88
    %v96 = vmul.f32 %v86, %v88
    %s97 = sld [smem:[#allocation2 + $0x1]]
    %v98 = vstv %s97
    %v99 = vmul.f32 %v79, %v98
    %v100 = vmul.f32 %v80, %v98
    %v101 = vmul.f32 %v81, %v98
    %v102 = vmul.f32 %v82, %v98
    %v103 = vmul.f32 %v83, %v98
    %v104 = vmul.f32 %v84, %v98
    %v105 = vmul.f32 %v85, %v98
    %v106 = vmul.f32 %v86, %v98
    %v115 = vrot.slane %v99, 1
    %v116 = vrot.slane %v100, 1
    %v117 = vrot.slane %v101, 1
    %v118 = vrot.slane %v102, 1
    %v119 = vrot.slane %v103, 1
    %v120 = vrot.slane %v104, 1
    %v121 = vrot.slane %v105, 1
    %v122 = vrot.slane %v106, 1
    %v131 = vadd.f32 %v89, %v115
    %v132 = vadd.f32 %v90, %v116
    %v133 = vadd.f32 %v91, %v117
    %v134 = vadd.f32 %v92, %v118
    %v135 = vadd.f32 %v93, %v119
    %v136 = vadd.f32 %v94, %v120
    %v137 = vadd.f32 %v95, %v121
    %v138 = vadd.f32 %v96, %v122
    %s139 = sld [smem:[#allocation2 + $0x2]]
    %v140 = vstv %s139
    %v141 = vmul.f32 %v79, %v140
    %v142 = vmul.f32 %v80, %v140
    %v143 = vmul.f32 %v81, %v140
    %v144 = vmul.f32 %v82, %v140
    %v145 = vmul.f32 %v83, %v140
    %v146 = vmul.f32 %v84, %v140
    %v147 = vmul.f32 %v85, %v140
    %v148 = vmul.f32 %v86, %v140
    %v157 = vrot.slane %v141, 2
    %v158 = vrot.slane %v142, 2
    %v159 = vrot.slane %v143, 2
    %v160 = vrot.slane %v144, 2
    %v161 = vrot.slane %v145, 2
    %v162 = vrot.slane %v146, 2
    %v163 = vrot.slane %v147, 2
    %v164 = vrot.slane %v148, 2
    %v173 = vadd.f32 %v131, %v157
    %v174 = vadd.f32 %v132, %v158
    %v175 = vadd.f32 %v133, %v159
    %v176 = vadd.f32 %v134, %v160
    %v177 = vadd.f32 %v135, %v161
    %v178 = vadd.f32 %v136, %v162
    %v179 = vadd.f32 %v137, %v163
    %v180 = vadd.f32 %v138, %v164
    %s181 = sld [smem:[#allocation2 + $0x3]]
    %v182 = vstv %s181
    %v183 = vmul.f32 %v79, %v182
    %v184 = vmul.f32 %v80, %v182
    %v185 = vmul.f32 %v81, %v182
    %v186 = vmul.f32 %v82, %v182
    %v187 = vmul.f32 %v83, %v182
    %v188 = vmul.f32 %v84, %v182
    %v189 = vmul.f32 %v85, %v182
    %v190 = vmul.f32 %v86, %v182
    %v199 = vrot.slane %v183, 3
    %v200 = vrot.slane %v184, 3
    %v201 = vrot.slane %v185, 3
    %v202 = vrot.slane %v186, 3
    %v203 = vrot.slane %v187, 3
    %v204 = vrot.slane %v188, 3
    %v205 = vrot.slane %v189, 3
    %v206 = vrot.slane %v190, 3
    %v215 = vadd.f32 %v173, %v199
    %v216 = vadd.f32 %v174, %v200
    %v217 = vadd.f32 %v175, %v201
    %v218 = vadd.f32 %v176, %v202
    %v219 = vadd.f32 %v177, %v203
    %v220 = vadd.f32 %v178, %v204
    %v221 = vadd.f32 %v179, %v205
    %v222 = vadd.f32 %v180, %v206
    %s223 = sld [smem:[#allocation5]]
    %v224 = vstv %s223
    %v225 = vadd.f32 %v215, %v224
    %v226 = vadd.f32 %v216, %v224
    %v227 = vadd.f32 %v217, %v224
    %v228 = vadd.f32 %v218, %v224
    %v229 = vadd.f32 %v219, %v224
    %v230 = vadd.f32 %v220, %v224
    %v231 = vadd.f32 %v221, %v224
    %v232 = vadd.f32 %v222, %v224
    %v233 = vmax.f32 %v225, 0.0
    %v234 = vmax.f32 %v226, 0.0
    %v235 = vmax.f32 %v227, 0.0
    %v236 = vmax.f32 %v228, 0.0
    %v237 = vmax.f32 %v229, 0.0
    %v238 = vmax.f32 %v230, 0.0
    %v239 = vmax.f32 %v231, 0.0
    %v240 = vmax.f32 %v232, 0.0
    %s241 = sld [smem:[#allocation2 + $0x80]]
    %v242 = vstv %s241
    %v243 = vmul.f32 %v79, %v242
    %v244 = vmul.f32 %v80, %v242
    %v245 = vmul.f32 %v81, %v242
    %v246 = vmul.f32 %v82, %v242
    %v247 = vmul.f32 %v83, %v242
    %v248 = vmul.f32 %v84, %v242
    %v249 = vmul.f32 %v85, %v242
    %v250 = vmul.f32 %v86, %v242
    %s251 = sld [smem:[#allocation2 + $0x81]]
    %v252 = vstv %s251
    %v253 = vmul.f32 %v79, %v252
    %v254 = vmul.f32 %v80, %v252
    %v255 = vmul.f32 %v81, %v252
    %v256 = vmul.f32 %v82, %v252
    %v257 = vmul.f32 %v83, %v252
    %v258 = vmul.f32 %v84, %v252
    %v259 = vmul.f32 %v85, %v252
    %v260 = vmul.f32 %v86, %v252
    %v269 = vrot.slane %v253, 1
    %v270 = vrot.slane %v254, 1
    %v271 = vrot.slane %v255, 1
    %v272 = vrot.slane %v256, 1
    %v273 = vrot.slane %v257, 1
    %v274 = vrot.slane %v258, 1
    %v275 = vrot.slane %v259, 1
    %v276 = vrot.slane %v260, 1
    %v285 = vadd.f32 %v243, %v269
    %v286 = vadd.f32 %v244, %v270
    %v287 = vadd.f32 %v245, %v271
    %v288 = vadd.f32 %v246, %v272
    %v289 = vadd.f32 %v247, %v273
    %v290 = vadd.f32 %v248, %v274
    %v291 = vadd.f32 %v249, %v275
    %v292 = vadd.f32 %v250, %v276
    %s293 = sld [smem:[#allocation2 + $0x82]]
    %v294 = vstv %s293
    %v295 = vmul.f32 %v79, %v294
    %v296 = vmul.f32 %v80, %v294
    %v297 = vmul.f32 %v81, %v294
    %v298 = vmul.f32 %v82, %v294
    %v299 = vmul.f32 %v83, %v294
    %v300 = vmul.f32 %v84, %v294
    %v301 = vmul.f32 %v85, %v294
    %v302 = vmul.f32 %v86, %v294
    %v311 = vrot.slane %v295, 2
    %v312 = vrot.slane %v296, 2
    %v313 = vrot.slane %v297, 2
    %v314 = vrot.slane %v298, 2
    %v315 = vrot.slane %v299, 2
    %v316 = vrot.slane %v300, 2
    %v317 = vrot.slane %v301, 2
    %v318 = vrot.slane %v302, 2
    %v327 = vadd.f32 %v285, %v311
    %v328 = vadd.f32 %v286, %v312
    %v329 = vadd.f32 %v287, %v313
    %v330 = vadd.f32 %v288, %v314
    %v331 = vadd.f32 %v289, %v315
    %v332 = vadd.f32 %v290, %v316
    %v333 = vadd.f32 %v291, %v317
    %v334 = vadd.f32 %v292, %v318
    %s335 = sld [smem:[#allocation2 + $0x83]]
    %v336 = vstv %s335
    %v337 = vmul.f32 %v79, %v336
    %v338 = vmul.f32 %v80, %v336
    %v339 = vmul.f32 %v81, %v336
    %v340 = vmul.f32 %v82, %v336
    %v341 = vmul.f32 %v83, %v336
    %v342 = vmul.f32 %v84, %v336
    %v343 = vmul.f32 %v85, %v336
    %v344 = vmul.f32 %v86, %v336
    %v353 = vrot.slane %v337, 3
    %v354 = vrot.slane %v338, 3
    %v355 = vrot.slane %v339, 3
    %v356 = vrot.slane %v340, 3
    %v357 = vrot.slane %v341, 3
    %v358 = vrot.slane %v342, 3
    %v359 = vrot.slane %v343, 3
    %v360 = vrot.slane %v344, 3
    %v369 = vadd.f32 %v327, %v353
    %v370 = vadd.f32 %v328, %v354
    %v371 = vadd.f32 %v329, %v355
    %v372 = vadd.f32 %v330, %v356
    %v373 = vadd.f32 %v331, %v357
    %v374 = vadd.f32 %v332, %v358
    %v375 = vadd.f32 %v333, %v359
    %v376 = vadd.f32 %v334, %v360
    %s377 = sld [smem:[#allocation5 + $0x1]]
    %v378 = vstv %s377
    %v379 = vadd.f32 %v369, %v378
    %v380 = vadd.f32 %v370, %v378
    %v381 = vadd.f32 %v371, %v378
    %v382 = vadd.f32 %v372, %v378
    %v383 = vadd.f32 %v373, %v378
    %v384 = vadd.f32 %v374, %v378
    %v385 = vadd.f32 %v375, %v378
    %v386 = vadd.f32 %v376, %v378
    %v387 = vmax.f32 %v379, 0.0
    %v388 = vmax.f32 %v380, 0.0
    %v389 = vmax.f32 %v381, 0.0
    %v390 = vmax.f32 %v382, 0.0
    %v391 = vmax.f32 %v383, 0.0
    %v392 = vmax.f32 %v384, 0.0
    %v393 = vmax.f32 %v385, 0.0
    %v394 = vmax.f32 %v386, 0.0
    %v403 = vrot.slane %v234, 7
    %vm404 = vcmask 1041409
    %v405 = vsel %vm404, %v403, %v233
    %v406 = vrot.slane %v235, 6
    %vm407 = vcmask 1042434
    %v408 = vsel %vm407, %v406, %v405
    %v409 = vrot.slane %v236, 5
    %vm410 = vcmask 1043459
    %v411 = vsel %vm410, %v409, %v408
    %v412 = vrot.slane %v237, 4
    %vm413 = vcmask 1044484
    %v414 = vsel %vm413, %v412, %v411
    %v415 = vrot.slane %v238, 3
    %vm416 = vcmask 1045509
    %v417 = vsel %vm416, %v415, %v414
    %v418 = vrot.slane %v239, 2
    %vm419 = vcmask 1046534
    %v420 = vsel %vm419, %v418, %v417
    %v421 = vrot.slane %v240, 1
    %vm422 = vcmask 1047559
    %v423 = vsel %vm422, %v421, %v420
    %v433 = vrot.slane %v388, 7
    %v434 = vsel %vm404, %v433, %v387
    %v435 = vrot.slane %v389, 6
    %v436 = vsel %vm407, %v435, %v434
    %v437 = vrot.slane %v390, 5
    %v438 = vsel %vm410, %v437, %v436
    %v439 = vrot.slane %v391, 4
    %v440 = vsel %vm413, %v439, %v438
    %v441 = vrot.slane %v392, 3
    %v442 = vsel %vm416, %v441, %v440
    %v443 = vrot.slane %v393, 2
    %v444 = vsel %vm419, %v443, %v442
    %v445 = vrot.slane %v394, 1
    %v446 = vsel %vm422, %v445, %v444
    %447 = vrot.lane.b32.xlu0 %v446, 64
    %v448 = vpop.permute.xlu0 %447
    %vm450 = vcmask 523264
    %v451 = vsel %vm450, %v423, %v448
    %v452 = vld [vmem:[#allocation7] sm:$0xff]
    %v453 = vld [vmem:[#allocation7 + $0x8] sm:$0xff]
    %v454 = vld [vmem:[#allocation7 + $0x10] sm:$0xff]
    %v455 = vld [vmem:[#allocation7 + $0x18] sm:$0xff]
    %v456 = vld [vmem:[#allocation7 + $0x20] sm:$0xff]
    %v457 = vld [vmem:[#allocation7 + $0x28] sm:$0xff]
    %v458 = vld [vmem:[#allocation7 + $0x30] sm:$0xff]
    %v459 = vld [vmem:[#allocation7 + $0x38] sm:$0xff]
    %v460 = vld [vmem:[#allocation7 + $0x40] sm:$0xff]
    %v461 = vld [vmem:[#allocation7 + $0x48] sm:$0xff]
    %v462 = vld [vmem:[#allocation7 + $0x50] sm:$0xff]
    %v463 = vld [vmem:[#allocation7 + $0x58] sm:$0xff]
    %v464 = vld [vmem:[#allocation7 + $0x60] sm:$0xff]
    %v465 = vld [vmem:[#allocation7 + $0x68] sm:$0xff]
    %v466 = vld [vmem:[#allocation7 + $0x70] sm:$0xff]
    %v467 = vld [vmem:[#allocation7 + $0x78] sm:$0xff]
    %v468 = vld [vmem:[#allocation7 + $0x80] sm:$0xff]
    %v469 = vld [vmem:[#allocation7 + $0x88] sm:$0xff]
    %v470 = vld [vmem:[#allocation7 + $0x90] sm:$0xff]
    %v471 = vld [vmem:[#allocation7 + $0x98] sm:$0xff]
    %v472 = vld [vmem:[#allocation7 + $0xa0] sm:$0xff]
    %v473 = vld [vmem:[#allocation7 + $0xa8] sm:$0xff]
    %v474 = vld [vmem:[#allocation7 + $0xb0] sm:$0xff]
    %v475 = vld [vmem:[#allocation7 + $0xb8] sm:$0xff]
    %v476 = vld [vmem:[#allocation7 + $0xc0] sm:$0xff]
    %v477 = vld [vmem:[#allocation7 + $0xc8] sm:$0xff]
    %v478 = vld [vmem:[#allocation7 + $0xd0] sm:$0xff]
    %v479 = vld [vmem:[#allocation7 + $0xd8] sm:$0xff]
    %v480 = vld [vmem:[#allocation7 + $0xe0] sm:$0xff]
    %v481 = vld [vmem:[#allocation7 + $0xe8] sm:$0xff]
    %v482 = vld [vmem:[#allocation7 + $0xf0] sm:$0xff]
    %v483 = vld [vmem:[#allocation7 + $0xf8] sm:$0xff]
    %v484 = vld [vmem:[#allocation7 + $0x100] sm:$0xff]
    %v485 = vld [vmem:[#allocation7 + $0x108] sm:$0xff]
    %v486 = vld [vmem:[#allocation7 + $0x110] sm:$0xff]
    %v487 = vld [vmem:[#allocation7 + $0x118] sm:$0xff]
    %v488 = vld [vmem:[#allocation7 + $0x120] sm:$0xff]
    %v489 = vld [vmem:[#allocation7 + $0x128] sm:$0xff]
    %v490 = vld [vmem:[#allocation7 + $0x130] sm:$0xff]
    %v491 = vld [vmem:[#allocation7 + $0x138] sm:$0xff]
    %v492 = vld [vmem:[#allocation7 + $0x140] sm:$0xff]
    %v493 = vld [vmem:[#allocation7 + $0x148] sm:$0xff]
    %v494 = vld [vmem:[#allocation7 + $0x150] sm:$0xff]
    %v495 = vld [vmem:[#allocation7 + $0x158] sm:$0xff]
    %v496 = vld [vmem:[#allocation7 + $0x160] sm:$0xff]
    %v497 = vld [vmem:[#allocation7 + $0x168] sm:$0xff]
    %v498 = vld [vmem:[#allocation7 + $0x170] sm:$0xff]
    %v499 = vld [vmem:[#allocation7 + $0x178] sm:$0xff]
    %v500 = vld [vmem:[#allocation7 + $0x180] sm:$0xff]
    %v501 = vld [vmem:[#allocation7 + $0x188] sm:$0xff]
    %v502 = vld [vmem:[#allocation7 + $0x190] sm:$0xff]
    %v503 = vld [vmem:[#allocation7 + $0x198] sm:$0xff]
    %v504 = vld [vmem:[#allocation7 + $0x1a0] sm:$0xff]
    %v505 = vld [vmem:[#allocation7 + $0x1a8] sm:$0xff]
    %v506 = vld [vmem:[#allocation7 + $0x1b0] sm:$0xff]
    %v507 = vld [vmem:[#allocation7 + $0x1b8] sm:$0xff]
    %v508 = vld [vmem:[#allocation7 + $0x1c0] sm:$0xff]
    %v509 = vld [vmem:[#allocation7 + $0x1c8] sm:$0xff]
    %v510 = vld [vmem:[#allocation7 + $0x1d0] sm:$0xff]
    %v511 = vld [vmem:[#allocation7 + $0x1d8] sm:$0xff]
    %v512 = vld [vmem:[#allocation7 + $0x1e0] sm:$0xff]
    %v513 = vld [vmem:[#allocation7 + $0x1e8] sm:$0xff]
    %v514 = vld [vmem:[#allocation7 + $0x1f0] sm:$0xff]
    %v515 = vld [vmem:[#allocation7 + $0x1f8] sm:$0xff]
    %v516 = vld [vmem:[%s4] sm:$0xf]
    %v518 = vlaneseq
    %v519 = vshrl.u32 %v518, 7
    %v520 = vsub.s32 0, %v519
    %v521 = vrot.slane %v516, %v520
    %v522 = vlaneseq
    %v523 = vshrl.u32 %v522, 7
    %v524 = vsub.s32 1, %v523
    %v525 = vrot.slane %v516, %v524
    %v526 = vlaneseq
    %v527 = vshrl.u32 %v526, 7
    %v528 = vsub.s32 2, %v527
    %v529 = vrot.slane %v516, %v528
    %v530 = vlaneseq
    %v531 = vshrl.u32 %v530, 7
    %v532 = vsub.s32 3, %v531
    %v533 = vrot.slane %v516, %v532
    %538 = vmatprep.subr.mxu0 %v513
    %539 = vmatpush1.msra.mxu0 %v512
    %540 = vmatprep.subr.mxu0 %v509
    %541 = vmatpush1.msra.mxu0 %v508
    %542 = vmatprep.subr.mxu0 %v505
    %543 = vmatpush1.msra.mxu0 %v504
    %544 = vmatprep.subr.mxu0 %v501
    %545 = vmatpush1.msra.mxu0 %v500
    %546 = vmatprep.subr.mxu0 %v497
    %547 = vmatpush1.msra.mxu0 %v496
    %548 = vmatprep.subr.mxu0 %v493
    %549 = vmatpush1.msra.mxu0 %v492
    %550 = vmatprep.subr.mxu0 %v489
    %551 = vmatpush1.msra.mxu0 %v488
    %552 = vmatprep.subr.mxu0 %v485
    %553 = vmatpush1.msra.mxu0 %v484
    %554 = vmatprep.subr.mxu0 %v481
    %555 = vmatpush1.msra.mxu0 %v480
    %556 = vmatprep.subr.mxu0 %v477
    %557 = vmatpush1.msra.mxu0 %v476
    %558 = vmatprep.subr.mxu0 %v473
    %559 = vmatpush1.msra.mxu0 %v472
    %560 = vmatprep.subr.mxu0 %v469
    %561 = vmatpush1.msra.mxu0 %v468
    %562 = vmatprep.subr.mxu0 %v465
    %563 = vmatpush1.msra.mxu0 %v464
    %564 = vmatprep.subr.mxu0 %v461
    %565 = vmatpush1.msra.mxu0 %v460
    %566 = vmatprep.subr.mxu0 %v457
    %567 = vmatpush1.msra.mxu0 %v456
    %568 = vmatprep.subr.mxu0 %v453
    %569 = vmatpush1.msra.mxu0 %v452
    %570 = vmatprep.subr.mxu0 0.0
    %571 = vmatpush2.msra.mxu0 0.0
    %572 = vmatprep.subr.mxu0 0.0
    %573 = vmatpush2.msra.mxu0 0.0
    %574 = vmatprep.subr.mxu0 0.0
    %575 = vmatpush2.msra.mxu0 0.0
    %576 = vmatprep.subr.mxu0 0.0
    %577 = vmatpush2.msra.mxu0 0.0
    %578 = vmatprep.subr.mxu0 0.0
    %579 = vmatpush2.msra.mxu0 0.0
    %580 = vmatprep.subr.mxu0 0.0
    %581 = vmatpush2.msra.mxu0 0.0
    %582 = vmatprep.subr.mxu0 0.0
    %583 = vmatpush2.msra.mxu0 0.0
    %584 = vmatprep.subr.mxu0 0.0
    %585 = vmatpush2.msra.mxu0 0.0
    %586 = vmatprep.subr.mxu0 0.0
    %587 = vmatpush2.msra.mxu0 0.0
    %588 = vmatprep.subr.mxu0 0.0
    %589 = vmatpush2.msra.mxu0 0.0
    %590 = vmatprep.subr.mxu0 0.0
    %591 = vmatpush2.msra.mxu0 0.0
    %592 = vmatprep.subr.mxu0 0.0
    %593 = vmatpush2.msra.mxu0 0.0
    %594 = vmatprep.subr.mxu0 0.0
    %595 = vmatpush2.msra.mxu0 0.0
    %596 = vmatprep.subr.mxu0 0.0
    %597 = vmatpush2.msra.mxu0 0.0
    %598 = vmatprep.subr.mxu0 0.0
    %599 = vmatpush2.msra.mxu0 0.0
    %600 = vmatprep.subr.mxu0 0.0
    %601 = vmatpush2.msra.mxu0 0.0
    %602 = vmatprep.mubr.f32.mxu0 0.0
    %603 = vmatmul.mubr.f32.gmra.mxu0 %v451
    %v604 = vpop.f32.mrf.mxu0
    %v605 = vadd.f32 %v521, %v604
    %v606 = vpop.f32.mrf.mxu0
    %v607 = vadd.f32 %v525, %v606
    %608 = vdwg.mxu0
    %609 = vmatprep.subr.mxu0 %v515
    %610 = vmatpush1.msra.mxu0 %v514
    %611 = vmatprep.subr.mxu0 %v511
    %612 = vmatpush1.msra.mxu0 %v510
    %613 = vmatprep.subr.mxu0 %v507
    %614 = vmatpush1.msra.mxu0 %v506
    %615 = vmatprep.subr.mxu0 %v503
    %616 = vmatpush1.msra.mxu0 %v502
    %617 = vmatprep.subr.mxu0 %v499
    %618 = vmatpush1.msra.mxu0 %v498
    %619 = vmatprep.subr.mxu0 %v495
    %620 = vmatpush1.msra.mxu0 %v494
    %621 = vmatprep.subr.mxu0 %v491
    %622 = vmatpush1.msra.mxu0 %v490
    %623 = vmatprep.subr.mxu0 %v487
    %624 = vmatpush1.msra.mxu0 %v486
    %625 = vmatprep.subr.mxu0 %v483
    %626 = vmatpush1.msra.mxu0 %v482
    %627 = vmatprep.subr.mxu0 %v479
    %628 = vmatpush1.msra.mxu0 %v478
    %629 = vmatprep.subr.mxu0 %v475
    %630 = vmatpush1.msra.mxu0 %v474
    %631 = vmatprep.subr.mxu0 %v471
    %632 = vmatpush1.msra.mxu0 %v470
    %633 = vmatprep.subr.mxu0 %v467
    %634 = vmatpush1.msra.mxu0 %v466
    %635 = vmatprep.subr.mxu0 %v463
    %636 = vmatpush1.msra.mxu0 %v462
    %637 = vmatprep.subr.mxu0 %v459
    %638 = vmatpush1.msra.mxu0 %v458
    %639 = vmatprep.subr.mxu0 %v455
    %640 = vmatpush1.msra.mxu0 %v454
    %641 = vmatprep.subr.mxu0 0.0
    %642 = vmatpush2.msra.mxu0 0.0
    %643 = vmatprep.subr.mxu0 0.0
    %644 = vmatpush2.msra.mxu0 0.0
    %645 = vmatprep.subr.mxu0 0.0
    %646 = vmatpush2.msra.mxu0 0.0
    %647 = vmatprep.subr.mxu0 0.0
    %648 = vmatpush2.msra.mxu0 0.0
    %649 = vmatprep.subr.mxu0 0.0
    %650 = vmatpush2.msra.mxu0 0.0
    %651 = vmatprep.subr.mxu0 0.0
    %652 = vmatpush2.msra.mxu0 0.0
    %653 = vmatprep.subr.mxu0 0.0
    %654 = vmatpush2.msra.mxu0 0.0
    %655 = vmatprep.subr.mxu0 0.0
    %656 = vmatpush2.msra.mxu0 0.0
    %657 = vmatprep.subr.mxu0 0.0
    %658 = vmatpush2.msra.mxu0 0.0
    %659 = vmatprep.subr.mxu0 0.0
    %660 = vmatpush2.msra.mxu0 0.0
    %661 = vmatprep.subr.mxu0 0.0
    %662 = vmatpush2.msra.mxu0 0.0
    %663 = vmatprep.subr.mxu0 0.0
    %664 = vmatpush2.msra.mxu0 0.0
    %665 = vmatprep.subr.mxu0 0.0
    %666 = vmatpush2.msra.mxu0 0.0
    %667 = vmatprep.subr.mxu0 0.0
    %668 = vmatpush2.msra.mxu0 0.0
    %669 = vmatprep.subr.mxu0 0.0
    %670 = vmatpush2.msra.mxu0 0.0
    %671 = vmatprep.subr.mxu0 0.0
    %672 = vmatpush2.msra.mxu0 0.0
    %673 = vmatprep.mubr.f32.mxu0 0.0
    %674 = vmatmul.mubr.f32.gmra.mxu0 %v451
    %v675 = vpop.f32.mrf.mxu0
    %v676 = vadd.f32 %v529, %v675
    %v677 = vpop.f32.mrf.mxu0
    %v678 = vadd.f32 %v533, %v677
    %679 = vdwg.mxu0
    %v680 = vmax.f32 %v605, 0.0
    %v681 = vmax.f32 %v607, 0.0
    %v682 = vmax.f32 %v676, 0.0
    %v683 = vmax.f32 %v678, 0.0
    %v684 = vld [vmem:[#allocation8] sm:$0xff]
    %v685 = vld [vmem:[#allocation8 + $0x8] sm:$0xff]
    %v686 = vld [vmem:[#allocation8 + $0x10] sm:$0xff]
    %v687 = vld [vmem:[#allocation8 + $0x18] sm:$0xff]
    %v688 = vld [vmem:[#allocation8 + $0x20] sm:$0xff]
    %v689 = vld [vmem:[#allocation8 + $0x28] sm:$0xff]
    %v690 = vld [vmem:[#allocation8 + $0x30] sm:$0xff]
    %v691 = vld [vmem:[#allocation8 + $0x38] sm:$0xff]
    %v692 = vld [vmem:[#allocation8 + $0x40] sm:$0xff]
    %v693 = vld [vmem:[#allocation8 + $0x48] sm:$0xff]
    %v694 = vld [vmem:[#allocation8 + $0x50] sm:$0xff]
    %v695 = vld [vmem:[#allocation8 + $0x58] sm:$0xff]
    %v696 = vld [vmem:[#allocation8 + $0x60] sm:$0xff]
    %v697 = vld [vmem:[#allocation8 + $0x68] sm:$0xff]
    %v698 = vld [vmem:[#allocation8 + $0x70] sm:$0xff]
    %v699 = vld [vmem:[#allocation8 + $0x78] sm:$0xff]
    %v700 = vld [vmem:[#allocation8 + $0x80] sm:$0xff]
    %v701 = vld [vmem:[#allocation8 + $0x88] sm:$0xff]
    %v702 = vld [vmem:[#allocation8 + $0x90] sm:$0xff]
    %v703 = vld [vmem:[#allocation8 + $0x98] sm:$0xff]
    %v704 = vld [vmem:[#allocation8 + $0xa0] sm:$0xff]
    %v705 = vld [vmem:[#allocation8 + $0xa8] sm:$0xff]
    %v706 = vld [vmem:[#allocation8 + $0xb0] sm:$0xff]
    %v707 = vld [vmem:[#allocation8 + $0xb8] sm:$0xff]
    %v708 = vld [vmem:[#allocation8 + $0xc0] sm:$0xff]
    %v709 = vld [vmem:[#allocation8 + $0xc8] sm:$0xff]
    %v710 = vld [vmem:[#allocation8 + $0xd0] sm:$0xff]
    %v711 = vld [vmem:[#allocation8 + $0xd8] sm:$0xff]
    %v712 = vld [vmem:[#allocation8 + $0xe0] sm:$0xff]
    %v713 = vld [vmem:[#allocation8 + $0xe8] sm:$0xff]
    %v714 = vld [vmem:[#allocation8 + $0xf0] sm:$0xff]
    %v715 = vld [vmem:[#allocation8 + $0xf8] sm:$0xff]
    %v716 = vld [vmem:[#allocation8 + $0x100] sm:$0xff]
    %v717 = vld [vmem:[#allocation8 + $0x108] sm:$0xff]
    %v718 = vld [vmem:[#allocation8 + $0x110] sm:$0xff]
    %v719 = vld [vmem:[#allocation8 + $0x118] sm:$0xff]
    %v720 = vld [vmem:[#allocation8 + $0x120] sm:$0xff]
    %v721 = vld [vmem:[#allocation8 + $0x128] sm:$0xff]
    %v722 = vld [vmem:[#allocation8 + $0x130] sm:$0xff]
    %v723 = vld [vmem:[#allocation8 + $0x138] sm:$0xff]
    %v724 = vld [vmem:[#allocation8 + $0x140] sm:$0xff]
    %v725 = vld [vmem:[#allocation8 + $0x148] sm:$0xff]
    %v726 = vld [vmem:[#allocation8 + $0x150] sm:$0xff]
    %v727 = vld [vmem:[#allocation8 + $0x158] sm:$0xff]
    %v728 = vld [vmem:[#allocation8 + $0x160] sm:$0xff]
    %v729 = vld [vmem:[#allocation8 + $0x168] sm:$0xff]
    %v730 = vld [vmem:[#allocation8 + $0x170] sm:$0xff]
    %v731 = vld [vmem:[#allocation8 + $0x178] sm:$0xff]
    %v732 = vld [vmem:[#allocation8 + $0x180] sm:$0xff]
    %v733 = vld [vmem:[#allocation8 + $0x188] sm:$0xff]
    %v734 = vld [vmem:[#allocation8 + $0x190] sm:$0xff]
    %v735 = vld [vmem:[#allocation8 + $0x198] sm:$0xff]
    %v736 = vld [vmem:[#allocation8 + $0x1a0] sm:$0xff]
    %v737 = vld [vmem:[#allocation8 + $0x1a8] sm:$0xff]
    %v738 = vld [vmem:[#allocation8 + $0x1b0] sm:$0xff]
    %v739 = vld [vmem:[#allocation8 + $0x1b8] sm:$0xff]
    %v740 = vld [vmem:[#allocation8 + $0x1c0] sm:$0xff]
    %v741 = vld [vmem:[#allocation8 + $0x1c8] sm:$0xff]
    %v742 = vld [vmem:[#allocation8 + $0x1d0] sm:$0xff]
    %v743 = vld [vmem:[#allocation8 + $0x1d8] sm:$0xff]
    %v744 = vld [vmem:[#allocation8 + $0x1e0] sm:$0xff]
    %v745 = vld [vmem:[#allocation8 + $0x1e8] sm:$0xff]
    %v746 = vld [vmem:[#allocation8 + $0x1f0] sm:$0xff]
    %v747 = vld [vmem:[#allocation8 + $0x1f8] sm:$0xff]
    %v748 = vld [vmem:[%s6] sm:$0x1]
    %v750 = vlaneseq
    %v751 = vshrl.u32 %v750, 7
    %v752 = vsub.s32 0, %v751
    %v753 = vrot.slane %v748, %v752
    %755 = vmatprep.subr.mxu0 0.0
    %756 = vmatpush1.msra.mxu0 %v699
    %757 = vmatprep.subr.mxu0 0.0
    %758 = vmatpush1.msra.mxu0 %v698
    %759 = vmatprep.subr.mxu0 0.0
    %760 = vmatpush1.msra.mxu0 %v697
    %761 = vmatprep.subr.mxu0 0.0
    %762 = vmatpush1.msra.mxu0 %v696
    %763 = vmatprep.subr.mxu0 0.0
    %764 = vmatpush1.msra.mxu0 %v695
    %765 = vmatprep.subr.mxu0 0.0
    %766 = vmatpush1.msra.mxu0 %v694
    %767 = vmatprep.subr.mxu0 0.0
    %768 = vmatpush1.msra.mxu0 %v693
    %769 = vmatprep.subr.mxu0 0.0
    %770 = vmatpush1.msra.mxu0 %v692
    %771 = vmatprep.subr.mxu0 0.0
    %772 = vmatpush1.msra.mxu0 %v691
    %773 = vmatprep.subr.mxu0 0.0
    %774 = vmatpush1.msra.mxu0 %v690
    %775 = vmatprep.subr.mxu0 0.0
    %776 = vmatpush1.msra.mxu0 %v689
    %777 = vmatprep.subr.mxu0 0.0
    %778 = vmatpush1.msra.mxu0 %v688
    %779 = vmatprep.subr.mxu0 0.0
    %780 = vmatpush1.msra.mxu0 %v687
    %781 = vmatprep.subr.mxu0 0.0
    %782 = vmatpush1.msra.mxu0 %v686
    %783 = vmatprep.subr.mxu0 0.0
    %784 = vmatpush1.msra.mxu0 %v685
    %785 = vmatprep.subr.mxu0 0.0
    %786 = vmatpush1.msra.mxu0 %v684
    %787 = vmatprep.subr.mxu0 0.0
    %788 = vmatpush2.msra.mxu0 %v715
    %789 = vmatprep.subr.mxu0 0.0
    %790 = vmatpush2.msra.mxu0 %v714
    %791 = vmatprep.subr.mxu0 0.0
    %792 = vmatpush2.msra.mxu0 %v713
    %793 = vmatprep.subr.mxu0 0.0
    %794 = vmatpush2.msra.mxu0 %v712
    %795 = vmatprep.subr.mxu0 0.0
    %796 = vmatpush2.msra.mxu0 %v711
    %797 = vmatprep.subr.mxu0 0.0
    %798 = vmatpush2.msra.mxu0 %v710
    %799 = vmatprep.subr.mxu0 0.0
    %800 = vmatpush2.msra.mxu0 %v709
    %801 = vmatprep.subr.mxu0 0.0
    %802 = vmatpush2.msra.mxu0 %v708
    %803 = vmatprep.subr.mxu0 0.0
    %804 = vmatpush2.msra.mxu0 %v707
    %805 = vmatprep.subr.mxu0 0.0
    %806 = vmatpush2.msra.mxu0 %v706
    %807 = vmatprep.subr.mxu0 0.0
    %808 = vmatpush2.msra.mxu0 %v705
    %809 = vmatprep.subr.mxu0 0.0
    %810 = vmatpush2.msra.mxu0 %v704
    %811 = vmatprep.subr.mxu0 0.0
    %812 = vmatpush2.msra.mxu0 %v703
    %813 = vmatprep.subr.mxu0 0.0
    %814 = vmatpush2.msra.mxu0 %v702
    %815 = vmatprep.subr.mxu0 0.0
    %816 = vmatpush2.msra.mxu0 %v701
    %817 = vmatprep.subr.mxu0 0.0
    %818 = vmatpush2.msra.mxu0 %v700
    %819 = vmatprep.mubr.f32.mxu0 %v681
    %820 = vmatmul.mubr.f32.gmra.mxu0 %v680
    %v821 = vpop.f32.mrf.mxu0
    %v822 = vadd.f32 %v753, %v821
    %v823 = vpop.f32.mrf.mxu0
    %824 = vdwg.mxu0
    %825 = vmatprep.subr.mxu0 0.0
    %826 = vmatpush1.msra.mxu0 %v731
    %827 = vmatprep.subr.mxu0 0.0
    %828 = vmatpush1.msra.mxu0 %v730
    %829 = vmatprep.subr.mxu0 0.0
    %830 = vmatpush1.msra.mxu0 %v729
    %831 = vmatprep.subr.mxu0 0.0
    %832 = vmatpush1.msra.mxu0 %v728
    %833 = vmatprep.subr.mxu0 0.0
    %834 = vmatpush1.msra.mxu0 %v727
    %835 = vmatprep.subr.mxu0 0.0
    %836 = vmatpush1.msra.mxu0 %v726
    %837 = vmatprep.subr.mxu0 0.0
    %838 = vmatpush1.msra.mxu0 %v725
    %839 = vmatprep.subr.mxu0 0.0
    %840 = vmatpush1.msra.mxu0 %v724
    %841 = vmatprep.subr.mxu0 0.0
    %842 = vmatpush1.msra.mxu0 %v723
    %843 = vmatprep.subr.mxu0 0.0
    %844 = vmatpush1.msra.mxu0 %v722
    %845 = vmatprep.subr.mxu0 0.0
    %846 = vmatpush1.msra.mxu0 %v721
    %847 = vmatprep.subr.mxu0 0.0
    %848 = vmatpush1.msra.mxu0 %v720
    %849 = vmatprep.subr.mxu0 0.0
    %850 = vmatpush1.msra.mxu0 %v719
    %851 = vmatprep.subr.mxu0 0.0
    %852 = vmatpush1.msra.mxu0 %v718
    %853 = vmatprep.subr.mxu0 0.0
    %854 = vmatpush1.msra.mxu0 %v717
    %855 = vmatprep.subr.mxu0 0.0
    %856 = vmatpush1.msra.mxu0 %v716
    %857 = vmatprep.subr.mxu0 0.0
    %858 = vmatpush2.msra.mxu0 %v747
    %859 = vmatprep.subr.mxu0 0.0
    %860 = vmatpush2.msra.mxu0 %v746
    %861 = vmatprep.subr.mxu0 0.0
    %862 = vmatpush2.msra.mxu0 %v745
    %863 = vmatprep.subr.mxu0 0.0
    %864 = vmatpush2.msra.mxu0 %v744
    %865 = vmatprep.subr.mxu0 0.0
    %866 = vmatpush2.msra.mxu0 %v743
    %867 = vmatprep.subr.mxu0 0.0
    %868 = vmatpush2.msra.mxu0 %v742
    %869 = vmatprep.subr.mxu0 0.0
    %870 = vmatpush2.msra.mxu0 %v741
    %871 = vmatprep.subr.mxu0 0.0
    %872 = vmatpush2.msra.mxu0 %v740
    %873 = vmatprep.subr.mxu0 0.0
    %874 = vmatpush2.msra.mxu0 %v739
    %875 = vmatprep.subr.mxu0 0.0
    %876 = vmatpush2.msra.mxu0 %v738
    %877 = vmatprep.subr.mxu0 0.0
    %878 = vmatpush2.msra.mxu0 %v737
    %879 = vmatprep.subr.mxu0 0.0
    %880 = vmatpush2.msra.mxu0 %v736
    %881 = vmatprep.subr.mxu0 0.0
    %882 = vmatpush2.msra.mxu0 %v735
    %883 = vmatprep.subr.mxu0 0.0
    %884 = vmatpush2.msra.mxu0 %v734
    %885 = vmatprep.subr.mxu0 0.0
    %886 = vmatpush2.msra.mxu0 %v733
    %887 = vmatprep.subr.mxu0 0.0
    %888 = vmatpush2.msra.mxu0 %v732
    %889 = vmatprep.mubr.f32.mxu0 %v683
    %890 = vmatmul.mubr.f32.gmra.mxu0 %v682
    %v891 = vpop.f32.mrf.mxu0
    %v892 = vadd.f32 %v822, %v891
    %v893 = vpop.f32.mrf.mxu0
    %894 = vdwg.mxu0
    %895 = vmax.xlane.f32.xlu0 %v892
    %v896 = vpop.xlane.xlu0 %895
    %v897 = vsub.f32 %v892, %v896
    %v898 = vmul.f32 %v897, 1.442695
    %v899 = vpow.pop %v898
    %900 = vadd.xlane.f32.xlu0 %v899
    %v901 = vpop.xlane.xlu0 %900
    %v902 = vrcp.pop %v901
    %v903 = vmul.f32 %v899, %v902
    %904 = vst [vmem:[%s7] sm:$0xff] %v903
    // Predicated region
    $region46: #{policy_forward.1} parent=1 // pred_check
      _
    $region47: #{policy_forward.1} parent=1 // pred_check_branch
      %906 = sbr.rel (0) target = $region49
    $region48: #{policy_forward.1} parent=1 // pred_region
      _
    $region49: #{policy_forward.1} parent=1 // pred_fallthru
      _
    // Predicated region
    $region50: #{policy_forward.1} parent=1 // pred_check
      _
    $region51: #{policy_forward.1} parent=1 // pred_check_branch
      %908 = sbr.rel (0) target = $region53
    $region52: #{policy_forward.1} parent=1 // pred_region
      _
    $region53: #{policy_forward.1} parent=1 // pred_fallthru
      _
    %909 = vsyncpa [#allocation3], 1
    %910 = vsyncpa [#allocation9], 1
    %911 = vsyncpa [#allocation4], 1
    %912 = vsyncpa [#allocation6], 1

</llo_original>
